<compile_context>
chip_gen: v7x
topology: tpu7x:2x2x1
jax: 0.10.0
libtpu: 0.0.40
codegen_flags: <defaults>
</compile_context>

<pallas_src>
import jax
import jax.numpy as jnp
from jax.experimental import pallas as pl
from jax.experimental.pallas import tpu as pltpu


_TOKENS_PER_STEP = 256      # tokens per grid step (amortizes per-step cost)
_ONEHOT_MAX_VOCAB = 2048    # opt-in MXU one-hot path only below this vocab
_GATHER_INFLIGHT = 8        # outstanding row DMAs on the HBM-gather fallback


def _round_up(x, m):
    return ((x + m - 1) // m) * m


def _vmem_budget_bytes():
    """Usable VMEM budget with headroom (v5e/v6e: 128 MiB, v7x: 64 MiB/TC)."""
    try:
        cap = pltpu.get_tpu_info().vmem_capacity_bytes
    except Exception:  # off-TPU tracing / older runtimes
        cap = 64 << 20
    return int(cap * 3 // 4)


# ---------------------------------------------------------------------------
# Kernels
# ---------------------------------------------------------------------------
def _row_gather_kernel(ids_ref, table_ref, out_ref):
    """Default path: table resident in VMEM, exact per-row gather per tile.

    ids_ref:   [n_pad] int32 in SMEM (scalar prefetch)
    table_ref: [vocab, d_model] VMEM (same block every step -> fetched once)
    out_ref:   [T, d_model] VMEM output tile (sublane/lane dense)
    """
    t_tokens = out_ref.shape[0]
    base = pl.program_id(0) * t_tokens

    @pl.loop(0, t_tokens)
    def _(t):
        idx = ids_ref[base + t]
        out_ref[pl.ds(t, 1), :] = table_ref[pl.ds(idx, 1), :]


def _onehot_kernel(ids_ref, table_ref, out_ref):
    """Opt-in small-vocab fast path: gather == one_hot(ids) @ table on the MXU.

    Fully vectorized; an f32 table may round through MXU passes, so the exact
    row-gather path stays the default.

    ids_ref:   [T, 1] int32 VMEM tile
    table_ref: [vocab, d_model] VMEM (resident)
    out_ref:   [T, d_model]
    """
    t_tokens = out_ref.shape[0]
    vocab = table_ref.shape[0]
    ids = ids_ref[...]                                                  # (T, 1)
    cols = jax.lax.broadcasted_iota(jnp.int32, (t_tokens, vocab), 1)    # (T, V)
    onehot = (cols == ids).astype(table_ref.dtype)
    out_ref[...] = jnp.dot(
        onehot, table_ref[...], preferred_element_type=jnp.float32
    ).astype(out_ref.dtype)


def _dma_gather_kernel(ids_ref, table_hbm, out_ref, sems):
    """Large-table fallback: table stays in HBM (memory_space=pl.ANY); gather
    rows with up to _GATHER_INFLIGHT outstanding DMAs into the output tile."""
    t_tokens = out_ref.shape[0]
    base = pl.program_id(0) * t_tokens

    def _start(t):
        idx = ids_ref[base + t]
        pltpu.make_async_copy(
            table_hbm.at[pl.ds(idx, 1), :],
            out_ref.at[pl.ds(t, 1), :],
            sems.at[t % _GATHER_INFLIGHT],
        ).start()

    # Prime the pipe with the first _GATHER_INFLIGHT row copies.
    @pl.loop(0, min(_GATHER_INFLIGHT, t_tokens))
    def _(t):
        _start(t)

    @pl.loop(0, t_tokens)
    def _(t):
        # Keep the next row DMA in flight before blocking on this slot.
        @pl.when(t + _GATHER_INFLIGHT < t_tokens)
        def _():
            _start(t + _GATHER_INFLIGHT)

        # Wait for one row-sized transfer on this slot (size-only descriptor).
        pltpu.make_async_copy(
            table_hbm.at[pl.ds(0, 1), :],
            out_ref.at[pl.ds(t, 1), :],
            sems.at[t % _GATHER_INFLIGHT],
        ).wait()


# ---------------------------------------------------------------------------
# Wrapper
# ---------------------------------------------------------------------------
def embedder_forward(x, embed_table, *,
                     tokens_per_step=_TOKENS_PER_STEP,
                     use_onehot=False,
                     onehot_max_vocab=_ONEHOT_MAX_VOCAB):
    """Pallas equivalent of nn.Embedding(vocab_size, d_model)(x).

    x:           [B, S] integer token ids
    embed_table: [vocab_size, d_model]
    returns:     [B, S, d_model] (same dtype as embed_table)
    """
    B, S = x.shape
    vocab_size, d_model = embed_table.shape
    out_dtype = embed_table.dtype

    n_tokens = B * S
    # Clamp ids so out-of-range values behave like jnp.take (never OOB).
    ids = jnp.clip(x.reshape(n_tokens).astype(jnp.int32), 0, vocab_size - 1)

    # Tokens per grid step: amortize per-step overhead, keep the output tile
    # sublane (>=8, multiple of 8) dense, pad token count to a whole tile.
    t_tok = min(tokens_per_step, _round_up(n_tokens, 8))
    t_tok = max(8, _round_up(t_tok, 8))
    n_pad = _round_up(n_tokens, t_tok)
    if n_pad != n_tokens:
        ids = jnp.pad(ids, (0, n_pad - n_tokens))  # pad rows gather row 0, sliced off
    num_tiles = n_pad // t_tok

    itemsize = jnp.dtype(out_dtype).itemsize
    table_bytes = vocab_size * d_model * itemsize
    tile_bytes = t_tok * d_model * itemsize
    budget = _vmem_budget_bytes()
    vmem_limit = int(min(max(table_bytes + 4 * tile_bytes + (8 << 20), 32 << 20),
                         budget))
    table_fits_vmem = table_bytes + 4 * tile_bytes + (4 << 20) <= budget

    out_shape = jax.ShapeDtypeStruct((n_pad, d_model), out_dtype)

    if table_fits_vmem and use_onehot and vocab_size <= onehot_max_vocab:
        # --- small vocab: resident table + one-hot matmul on the MXU --------
        out_flat = pl.pallas_call(
            _onehot_kernel,
            grid=(num_tiles,),
            in_specs=[
                pl.BlockSpec((t_tok, 1), lambda i: (i, 0)),             # ids tile
                pl.BlockSpec((vocab_size, d_model), lambda i: (0, 0)),  # resident table
            ],
            out_specs=pl.BlockSpec((t_tok, d_model), lambda i: (i, 0)),
            out_shape=out_shape,
            compiler_params=pltpu.CompilerParams(
                dimension_semantics=("parallel",),
                vmem_limit_bytes=vmem_limit,
            ),
        )(ids.reshape(n_pad, 1), embed_table)

    elif table_fits_vmem:
        # --- default: resident table + exact in-kernel row gather -----------
        grid_spec = pltpu.PrefetchScalarGridSpec(
            num_scalar_prefetch=1,
            grid=(num_tiles,),
            in_specs=[
                pl.BlockSpec((vocab_size, d_model), lambda i, ids_ref: (0, 0)),
            ],
            out_specs=pl.BlockSpec((t_tok, d_model), lambda i, ids_ref: (i, 0)),
        )
        out_flat = pl.pallas_call(
            _row_gather_kernel,
            grid_spec=grid_spec,
            out_shape=out_shape,
            compiler_params=pltpu.CompilerParams(
                dimension_semantics=("parallel",),
                vmem_limit_bytes=vmem_limit,
            ),
        )(ids, embed_table)

    else:
        # --- huge table: leave it in HBM, manual multi-outstanding DMA gather
        grid_spec = pltpu.PrefetchScalarGridSpec(
            num_scalar_prefetch=1,
            grid=(num_tiles,),
            in_specs=[pl.BlockSpec(memory_space=pl.ANY)],
            out_specs=pl.BlockSpec((t_tok, d_model), lambda i, ids_ref: (i, 0)),
            scratch_shapes=[pltpu.SemaphoreType.DMA((_GATHER_INFLIGHT,))],
        )
        out_flat = pl.pallas_call(
            _dma_gather_kernel,
            grid_spec=grid_spec,
            out_shape=out_shape,
            compiler_params=pltpu.CompilerParams(
                dimension_semantics=("parallel",),
                vmem_limit_bytes=int(min(max(4 * tile_bytes + (16 << 20),
                                             32 << 20), budget)),
            ),
        )(ids, embed_table)

    return out_flat[:n_tokens].reshape(B, S, d_model)


if __name__ == "__main__":
    # Small shapes consistent with the module's forward.
    batch, seq = 2, 8
    vocab_size, d_model = 32, 128

    key = jax.random.PRNGKey(0)
    k_ids, k_w = jax.random.split(key)

    # Deterministic "parameters": nn.Embedding weight ~ N(0, 1).
    embed_table = jax.random.normal(k_w, (vocab_size, d_model), dtype=jnp.float32)
    x = jax.random.randint(k_ids, (batch, seq), 0, vocab_size, dtype=jnp.int32)

    ref = jnp.take(embed_table, x, axis=0)          # == nn.Embedding lookup

    # Default path: resident-table row gather (bit-exact).
    out = jax.block_until_ready(embedder_forward(x, embed_table))
    assert out.shape == (batch, seq, d_model)
    assert jnp.array_equal(out, ref), "row-gather path mismatch vs reference"

    # Same path with a smaller tile so the grid has >1 step (covers padding
    # and program_id-based indexing).
    out_multi = jax.block_until_ready(
        embedder_forward(x, embed_table, tokens_per_step=8))
    assert jnp.array_equal(out_multi, ref), "multi-tile path mismatch vs reference"

    # Optional small-vocab MXU one-hot path (may round through MXU passes).
    out_mxu = jax.block_until_ready(
        embedder_forward(x, embed_table, use_onehot=True))
    assert jnp.allclose(out_mxu, ref, rtol=2e-2, atol=2e-2), \
        "one-hot MXU path mismatch vs reference"

    print("KERNEL_OK")
</pallas_src>

<mosaic_0001>
module attributes {stable_mosaic.version = 11 : i64} {
  func.func @_row_gather_kernel(%arg0: i32, %arg1: memref<16xi32, #tpu.memory_space<smem>>, %arg2: memref<32x128xf32, #tpu.memory_space<vmem>>, %arg3: memref<16x128xf32, #tpu.memory_space<vmem>>) attributes {dimension_semantics = [#tpu.dimension_semantics<parallel>], iteration_bounds = array<i64: 1>, scalar_prefetch = 1 : i64, scratch_operands = 0 : i64, tpu.core_type = #tpu.core_type<tc>, window_params = [{pipeline_mode = #tpu.pipeline_mode<synchronous>, transform_indices = @transform_0, window_bounds = array<i64: 32, 128>}, {transform_indices = @transform_1, window_bounds = array<i64: 16, 128>}]} {
    %c16_i32 = arith.constant 16 : i32
    %0 = arith.muli %arg0, %c16_i32 : i32
    %c0_i32 = arith.constant 0 : i32
    %c16_i32_0 = arith.constant 16 : i32
    %1 = arith.addi %c0_i32, %c16_i32_0 : i32
    %c1_i32 = arith.constant 1 : i32
    scf.for %arg4 = %c0_i32 to %1 step %c1_i32  : i32 {
      %c1_i32_2 = arith.constant 1 : i32
      %2 = arith.muli %arg4, %c1_i32_2 : i32
      %c0_i32_3 = arith.constant 0 : i32
      %3 = arith.addi %c0_i32_3, %2 : i32
      %4 = arith.addi %0, %3 : i32
      %5 = arith.index_cast %4 : i32 to index
      %6 = memref.load %arg1[%5] : memref<16xi32, #tpu.memory_space<smem>>
      %7 = arith.index_cast %6 : i32 to index
      %c0 = arith.constant 0 : index
      %8 = vector.load %arg2[%7, %c0] : memref<32x128xf32, #tpu.memory_space<vmem>>, vector<1x128xf32>
      %9 = arith.index_cast %3 : i32 to index
      %c0_4 = arith.constant 0 : index
      %10 = vector.load %arg3[%9, %c0_4] : memref<16x128xf32, #tpu.memory_space<vmem>>, vector<1x128xf32>
      tpu.vector_store %arg3[%9, %c0_4], %8 {strides = array<i32>} : memref<16x128xf32, #tpu.memory_space<vmem>>, vector<1x128xf32>,
    }
    %c16_i32_1 = arith.constant 16 : i32
    return
  }
  func.func @transform_0(%arg0: i32, %arg1: memref<16xi32, #tpu.memory_space<smem>>) -> (i32, i32) {
    %c0_i32 = arith.constant 0 : i32
    %c0_i32_0 = arith.constant 0 : i32
    %c0_i32_1 = arith.constant 0 : i32
    return %c0_i32, %c0_i32_0 : i32, i32
  }
  func.func @transform_1(%arg0: i32, %arg1: memref<16xi32, #tpu.memory_space<smem>>) -> (i32, i32) {
    %c0_i32 = arith.constant 0 : i32
    %c0_i32_0 = arith.constant 0 : i32
    return %arg0, %c0_i32 : i32, i32
  }
}

</mosaic_0001>

<llo_original>
// kernel: tpu_custom_call.1
$region0: #{tpu_custom_call.1}
  #allocation0 [shape = 'u32[]', space=smem, size = 0x4, offset = 0x4, fixed_abs, tag = 'smem constant byte address 0x4 - core index']
  #allocation1 [shape = 'u32[144,128]{1,0:T(1,128)}', space=vmem, size = 0x12000, scoped, tag = 'internal scratch']
  #allocation2 [shape = 's32[1]{0}', space=sflag, size = 0x4, scoped, tag = 'scoped memory for tpu_custom_call.1']
  #allocation3 [shape = 'u8[512]{0}', space=smem, size = 0x200, scoped, tag = 'prefetched SMEM operand 0']
  %s0 = inlined_call_operand.hbm [shape: s32[16], index: 0, kind: input, shape index: {}]
  %s1 = inlined_call_operand.hbm [shape: f32[32,128], index: 1, kind: input, shape index: {}]
  %s2 = inlined_call_operand.hbm [shape: f32[16,128], index: 2, kind: output, shape index: {}]
  %s3 = sld [smem:[#allocation0]]
  $region25: #{tpu_custom_call.1} parent=0
    _
  %s5 = ssub.s32 1, %s3
  %s6 = scalar_select 0, %s5, %s3
  %8 = dma.hbm_to_smem %s0, 16, [#allocation3], [#allocation2]
  %9 = dma.done [#allocation2], 16
  %10 = sfence
  $region1: #{tpu_custom_call.1} parent=0
    #allocation4 [shape = 'u8[16384]{0}', space=vmem, size = 0x4000, scoped, tag = 'input window, operand 1, single buffered']
    #allocation5 [shape = 's32[1]{0}', space=sflag, size = 0x4, scoped, tag = 'scoped memory for tpu_custom_call.1']
    #allocation6 [shape = 's32[1]{0}', space=sflag, size = 0x4, scoped, tag = 'scoped memory for tpu_custom_call.1']
    #allocation7 [shape = 'u8[8192]{0}', space=vmem, size = 0x2000, scoped, tag = 'output window, operand 0, single buffered']
    %11 = vsyncpa [#allocation5], 0
    %12 = vsyncpa [#allocation6], 0
    // Predicated region
    $region2: #{tpu_custom_call.1} parent=1 // pred_check
      _
    $region3: #{tpu_custom_call.1} parent=1 // pred_check_branch
      %14 = sbr.rel (0) target = $region5
    $region4: #{tpu_custom_call.1} parent=1 // pred_region
      %s16 = ssub.s32 512, 512
      %17 = vsyncadd [#allocation5], %s16
      %s18 = sshll.u32 [#allocation4], 4
      %s19 = int_to_ptr.vmem [resolvable:$true] %s18
      %24 = dma.hbm_to_vmem [thread:$0]  %s1, 512, %s19, [#allocation5], 128, 128, 8
    $region5: #{tpu_custom_call.1} parent=1 // pred_fallthru
      _
    // Predicated region
    $region6: #{tpu_custom_call.1} parent=1 // pred_check
      _
    $region7: #{tpu_custom_call.1} parent=1 // pred_check_branch
      %26 = sbr.rel (0) target = $region9
    $region8: #{tpu_custom_call.1} parent=1 // pred_region
      %27 = dma.done [#allocation5], 512
    $region9: #{tpu_custom_call.1} parent=1 // pred_fallthru
      _
    %s28 = smul.u32 0, 16
    loop: start=0, step=1, limit=16
    $region10: #{tpu_custom_call.1} parent=1 // loop_pre_header
      _
    $region11: #{tpu_custom_call.1} parent=1 // loop_header
      %s30 = sphi 0, %s34
      %p31 = scmp.ge.s32.totalorder %s30, 16
    $region12: #{tpu_custom_call.1} parent=1 // loop_header_branch
      %33 = sbr.rel (%p31) target = $region16
    $region13: #{tpu_custom_call.1} parent=1 // loop_body
      %s35 = sadd.s32 %s28, %s30
      %s36 = sld [smem:[#allocation3 + %s35]]
      %s37 = scalar_lea.vmem [#allocation4], %s36
      %v38 = vld [vmem:[%s37] sm:$0x1]
      %s39 = scalar_lea.vmem [#allocation7], %s30
      %40 = vst [vmem:[%s39] sm:$0x1] %v38
    $region14: #{tpu_custom_call.1} parent=1 // loop_footer
      %s34 = sadd.s32 1, %s30
    $region15: #{tpu_custom_call.1} parent=1 // loop_footer_branch
      %29 = sbr.rel target = $region11
    $region16: #{tpu_custom_call.1} parent=1 // loop_exit
      _
    // Predicated region
    $region17: #{tpu_custom_call.1} parent=1 // pred_check
      _
    $region18: #{tpu_custom_call.1} parent=1 // pred_check_branch
      %42 = sbr.rel (0) target = $region20
    $region19: #{tpu_custom_call.1} parent=1 // pred_region
      %s44 = ssub.s32 256, 256
      %45 = vsyncadd [#allocation6], %s44
      %s46 = sshll.u32 [#allocation7], 4
      %s47 = int_to_ptr.vmem [resolvable:$true] %s46
      %52 = dma.vmem_to_hbm [thread:$0]  %s47, 256, %s2, [#allocation6], 128, 128, 8
    $region20: #{tpu_custom_call.1} parent=1 // pred_fallthru
      _
    // Predicated region
    $region21: #{tpu_custom_call.1} parent=1 // pred_check
      _
    $region22: #{tpu_custom_call.1} parent=1 // pred_check_branch
      %54 = sbr.rel (0) target = $region24
    $region23: #{tpu_custom_call.1} parent=1 // pred_region
      %55 = dma.done [#allocation6], 256
    $region24: #{tpu_custom_call.1} parent=1 // pred_fallthru
      _
    %56 = vsyncpa [#allocation5], 1
    %57 = vsyncpa [#allocation6], 1

</llo_original>
